<compile_context>
chip_gen: v6e
topology: v6e:2x2x1
jax: 0.10.0
libtpu: 0.0.40
codegen_flags: <defaults>
</compile_context>

<pallas_src>
import functools

import jax
import jax.numpy as jnp
from jax import lax
from jax.experimental import pallas as pl
from jax.experimental.pallas import tpu as pltpu


def _round_up(x, m):
    return (x + m - 1) // m * m


# ---------------------------------------------------------------------------
# Path 1: small vocab -- table resident in VMEM, counts @ table on the MXU.
# ---------------------------------------------------------------------------
def _bow_resident_kernel(ids_ref, table_ref, bias_ref, out_ref):
    # ids_ref  : (Bt, T) int32   (one batch tile of token ids)
    # table_ref: (V, D)          (same block every step -> stays resident)
    # bias_ref : (1, D)
    # out_ref  : (Bt, D) f32
    ids = ids_ref[...]
    Bt, T = ids.shape
    V = table_ref.shape[0]

    # counts[b, v] = number of times token v appears in row b.
    # Out-of-range ids match no vocab slot -> contribute zero (deviation: no raise).
    onehot = (ids[:, :, None]
              == lax.broadcasted_iota(jnp.int32, (Bt, T, V), 2)).astype(jnp.float32)
    counts = onehot.sum(axis=1)                                   # (Bt, V)

    acc = jnp.dot(counts, table_ref[...].astype(jnp.float32),
                  preferred_element_type=jnp.float32)             # (Bt, D) on MXU
    out_ref[...] = acc + bias_ref[...].astype(jnp.float32)


def _bow_resident(idx, emb_table, bias):
    B, T = idx.shape
    V, D = emb_table.shape
    Bt = 8                                    # fill all 8 sublanes per output tile
    Bp = _round_up(B, Bt)
    if Bp != B:
        # Cheap: pads only the tiny id matrix (token 0 is a valid id); padded
        # output rows are sliced off below.  The table itself is never padded.
        idx = jnp.pad(idx, ((0, Bp - B), (0, 0)))
    bias2 = bias.reshape(1, D)
    itemsize = emb_table.dtype.itemsize

    out = pl.pallas_call(
        _bow_resident_kernel,
        grid_spec=pltpu.PrefetchScalarGridSpec(
            num_scalar_prefetch=0,
            grid=(Bp // Bt,),
            in_specs=[
                pl.BlockSpec((Bt, T), lambda i: (i, 0)),   # ids tile
                pl.BlockSpec((V, D), lambda i: (0, 0)),    # whole table, resident
                pl.BlockSpec((1, D), lambda i: (0, 0)),    # bias, resident
            ],
            out_specs=pl.BlockSpec((Bt, D), lambda i: (i, 0)),
        ),
        out_shape=jax.ShapeDtypeStruct((Bp, D), jnp.float32),
        compiler_params=pltpu.CompilerParams(
            dimension_semantics=("parallel",),
        ),
        cost_estimate=pl.CostEstimate(
            flops=2 * Bp * V * D + Bp * T * V,
            transcendentals=0,
            bytes_accessed=V * D * itemsize + Bp * T * 4 + Bp * D * 4 + D * 4,
        ),
    )(idx, emb_table, bias2)
    return out[:B]


# ---------------------------------------------------------------------------
# Path 2: large vocab -- table stays in HBM, chunked double-buffered row gather.
# ---------------------------------------------------------------------------
def _bow_gather_kernel(idx_ref, table_hbm, bias_ref, out_ref, buf, sem, acc,
                       *, T, TC):
    # idx_ref  : (B*T,) int32 in SMEM (scalar prefetch, flattened)
    # table_hbm: (V, D) in HBM (memory_space=pl.ANY) -- manual DMA gather
    # bias_ref : (1, D) VMEM
    # out_ref  : (1, D) f32 output row for batch element b
    # buf      : (2, TC, D) VMEM double buffer of gathered rows
    # sem      : (2, TC) DMA semaphores
    # acc      : (TC, D) f32 sublane-filled accumulator
    b = pl.program_id(0)
    base = b * T
    n_chunks = pl.cdiv(T, TC)
    V = table_hbm.shape[0]

    def issue(c, slot):
        # Start TC independent row DMAs for chunk c into buffer `slot`.
        for j in range(TC):
            pos = jnp.minimum(c * TC + j, T - 1)          # keep SMEM read in bounds
            tok = jnp.clip(idx_ref[base + pos], 0, V - 1)  # no OOB DMA for bad ids
            pltpu.make_async_copy(table_hbm.at[tok], buf.at[slot, j],
                                  sem.at[slot, j]).start()

    def wait_chunk(slot):
        for j in range(TC):
            pltpu.make_async_copy(table_hbm.at[0], buf.at[slot, j],
                                  sem.at[slot, j]).wait()

    acc[...] = jnp.zeros_like(acc)
    issue(0, 0)                                            # prime slot 0

    @pl.loop(0, n_chunks)
    def _(c):
        slot = c % 2
        wait_chunk(slot)

        @pl.when(c + 1 < n_chunks)
        def _prefetch_next():
            issue(c + 1, 1 - slot)                         # overlap next chunk's DMAs

        # Mask rows past T (partial last chunk), cast the whole chunk at once.
        row = c * TC + lax.broadcasted_iota(jnp.int32, (TC, 1), 0)
        chunk = jnp.where(row < T, buf[slot].astype(jnp.float32), 0.0)
        acc[...] += chunk                                  # full (8, D) sublane adds

    # Single cross-sublane reduce (XLU) + bias at the end.
    out_ref[...] = (acc[...].sum(axis=0, keepdims=True)
                    + bias_ref[...].astype(jnp.float32))


def _bow_gather(idx, emb_table, bias, *, tc=8):
    B, T = idx.shape
    V, D = emb_table.shape
    idx_flat = idx.reshape(B * T)              # 1-D SMEM: no lane-dim padding waste
    bias2 = bias.reshape(1, D)
    itemsize = emb_table.dtype.itemsize

    kernel = functools.partial(_bow_gather_kernel, T=T, TC=tc)

    out = pl.pallas_call(
        kernel,
        grid_spec=pltpu.PrefetchScalarGridSpec(
            num_scalar_prefetch=1,             # idx_flat -> SMEM
            grid=(B,),
            in_specs=[
                pl.BlockSpec(memory_space=pl.ANY),                 # table stays in HBM
                pl.BlockSpec((1, D), lambda b, idx_ref: (0, 0)),   # bias resident
            ],
            out_specs=pl.BlockSpec((1, D), lambda b, idx_ref: (b, 0)),
            scratch_shapes=[
                pltpu.VMEM((2, tc, D), emb_table.dtype),           # double buffer
                pltpu.SemaphoreType.DMA((2, tc)),
                pltpu.VMEM((tc, D), jnp.float32),                  # accumulator
            ],
        ),
        out_shape=jax.ShapeDtypeStruct((B, D), jnp.float32),
        compiler_params=pltpu.CompilerParams(
            dimension_semantics=("parallel",),
        ),
        cost_estimate=pl.CostEstimate(
            flops=B * T * D,
            transcendentals=0,
            bytes_accessed=B * T * (4 + D * itemsize) + B * D * 4 + D * 4,
        ),
    )(idx_flat, emb_table, bias2)
    return out


# ---------------------------------------------------------------------------
# Public forward: dispatch on table / intermediate size.
# ---------------------------------------------------------------------------
def bow_forward(inputs, emb_table, bias, *, vmem_budget_bytes=4 * 1024 * 1024):
    """inputs: [B, T] int ids; emb_table: [V, D]; bias: [D] -> [B, D] f32."""
    B, T = inputs.shape
    V, D = emb_table.shape
    assert V < 2**31, "token ids must fit in int32"
    idx = inputs.astype(jnp.int32)

    table_bytes = V * D * emb_table.dtype.itemsize
    onehot_bytes = 8 * T * V * 4        # in-kernel counts intermediate (Bt=8)
    if table_bytes + onehot_bytes <= vmem_budget_bytes:
        return _bow_resident(idx, emb_table, bias)
    return _bow_gather(idx, emb_table, bias)


if __name__ == "__main__":
    key = jax.random.PRNGKey(0)
    k_emb, k_idx, k_bias_nz, k_emb2, k_bias2, k_idx2 = jax.random.split(key, 6)

    # --- demo shapes consistent with BOW.__init__/forward (small vocab path) ---
    vocab_size, embedding_dim, batch, seq = 32, 32, 2, 8
    emb_table = jax.random.normal(k_emb, (vocab_size, embedding_dim), dtype=jnp.float32)
    bias = jnp.zeros((embedding_dim,), dtype=jnp.float32)   # nn.Parameter(zeros)
    inputs = jax.random.randint(k_idx, (batch, seq), 0, vocab_size, dtype=jnp.int32)

    out = jax.block_until_ready(bow_forward(inputs, emb_table, bias))
    ref = jnp.take(emb_table, inputs, axis=0).sum(axis=1) + bias[None, :]
    assert out.shape == (batch, embedding_dim)
    assert jnp.allclose(out, ref, atol=1e-5, rtol=1e-5), "resident path mismatch"

    # Same path with a non-zero bias (the module's bias is trainable).
    bias_nz = jax.random.normal(k_bias_nz, (embedding_dim,), dtype=jnp.float32)
    out_nz = jax.block_until_ready(bow_forward(inputs, emb_table, bias_nz))
    assert jnp.allclose(out_nz, ref + bias_nz[None, :], atol=1e-5, rtol=1e-5), \
        "resident path (nonzero bias) mismatch"

    # --- large-vocab path, forced at small shapes to validate the manual
    #     double-buffered DMA gather (T not a multiple of the chunk size). ---
    V2, D2, B2, T2 = 512, 128, 3, 20
    emb2 = jax.random.normal(k_emb2, (V2, D2), dtype=jnp.float32)
    bias2 = jax.random.normal(k_bias2, (D2,), dtype=jnp.float32)
    ids2 = jax.random.randint(k_idx2, (B2, T2), 0, V2, dtype=jnp.int32)

    out2 = jax.block_until_ready(_bow_gather(ids2, emb2, bias2))
    ref2 = jnp.take(emb2, ids2, axis=0).sum(axis=1) + bias2[None, :]
    assert out2.shape == (B2, D2)
    assert jnp.allclose(out2, ref2, atol=1e-4, rtol=1e-4), "gather path mismatch"

    print("KERNEL_OK")
</pallas_src>

<mosaic_0001>
module attributes {stable_mosaic.version = 11 : i64} {
  func.func @_bow_resident_kernel(%arg0: i32, %arg1: memref<8x8xi32, #tpu.memory_space<vmem>>, %arg2: memref<32x32xf32, #tpu.memory_space<vmem>>, %arg3: memref<1x32xf32, #tpu.memory_space<vmem>>, %arg4: memref<8x32xf32, #tpu.memory_space<vmem>>) attributes {dimension_semantics = [#tpu.dimension_semantics<parallel>], iteration_bounds = array<i64: 1>, scalar_prefetch = 0 : i64, scratch_operands = 0 : i64, tpu.core_type = #tpu.core_type<tc>, window_params = [{transform_indices = @transform_0, window_bounds = array<i64: 8, 8>}, {pipeline_mode = #tpu.pipeline_mode<synchronous>, transform_indices = @transform_1, window_bounds = array<i64: 32, 32>}, {pipeline_mode = #tpu.pipeline_mode<synchronous>, transform_indices = @transform_2, window_bounds = array<i64: 1, 32>}, {transform_indices = @transform_3, window_bounds = array<i64: 8, 32>}]} {
    %c0 = arith.constant 0 : index
    %c0_0 = arith.constant 0 : index
    %0 = vector.load %arg1[%c0, %c0_0] : memref<8x8xi32, #tpu.memory_space<vmem>>, vector<8x8xi32>
    %1 = vector.shape_cast %0 : vector<8x8xi32> to vector<8x8x1xi32>
    %2 = tpu.iota {dimensions = array<i32: 2>} : vector<8x8x32xi32>
    %3 = vector.broadcast %1 : vector<8x8x1xi32> to vector<8x8x32xi32>
    %4 = arith.cmpi eq, %3, %2 : vector<8x8x32xi32>
    %5 = arith.extui %4 : vector<8x8x32xi1> to vector<8x8x32xi32>
    %6 = arith.sitofp %5 : vector<8x8x32xi32> to vector<8x8x32xf32>
    %cst = arith.constant dense<0.000000e+00> : vector<8x32xf32>
    %7 = vector.multi_reduction <add>, %6, %cst [1] : vector<8x8x32xf32> to vector<8x32xf32>
    %c0_1 = arith.constant 0 : index
    %c0_2 = arith.constant 0 : index
    %8 = vector.load %arg2[%c0_1, %c0_2] : memref<32x32xf32, #tpu.memory_space<vmem>>, vector<32x32xf32>
    %cst_3 = arith.constant dense<0.000000e+00> : vector<8x32xf32>
    %9 = tpu.matmul %7, %8, %cst_3 {dimension_numbers = #tpu.dot_dimension_numbers<[1], [0], [0], [1], [0, 0, 1, 1], [], []>} : vector<8x32xf32>, vector<32x32xf32>, vector<8x32xf32> -> vector<8x32xf32>
    %c0_4 = arith.constant 0 : index
    %c0_5 = arith.constant 0 : index
    %10 = vector.load %arg3[%c0_4, %c0_5] : memref<1x32xf32, #tpu.memory_space<vmem>>, vector<1x32xf32>
    %11 = vector.broadcast %10 : vector<1x32xf32> to vector<8x32xf32>
    %12 = arith.addf %9, %11 : vector<8x32xf32>
    %c0_6 = arith.constant 0 : index
    %c0_7 = arith.constant 0 : index
    %13 = vector.load %arg4[%c0_6, %c0_7] : memref<8x32xf32, #tpu.memory_space<vmem>>, vector<8x32xf32>
    tpu.vector_store %arg4[%c0_6, %c0_7], %12 {strides = array<i32>} : memref<8x32xf32, #tpu.memory_space<vmem>>, vector<8x32xf32>,
    return
  }
  func.func @transform_0(%arg0: i32) -> (i32, i32) {
    %c0_i32 = arith.constant 0 : i32
    %c0_i32_0 = arith.constant 0 : i32
    return %arg0, %c0_i32 : i32, i32
  }
  func.func @transform_1(%arg0: i32) -> (i32, i32) {
    %c0_i32 = arith.constant 0 : i32
    %c0_i32_0 = arith.constant 0 : i32
    %c0_i32_1 = arith.constant 0 : i32
    return %c0_i32, %c0_i32_0 : i32, i32
  }
  func.func @transform_2(%arg0: i32) -> (i32, i32) {
    %c0_i32 = arith.constant 0 : i32
    %c0_i32_0 = arith.constant 0 : i32
    %c0_i32_1 = arith.constant 0 : i32
    return %c0_i32, %c0_i32_0 : i32, i32
  }
  func.func @transform_3(%arg0: i32) -> (i32, i32) {
    %c0_i32 = arith.constant 0 : i32
    %c0_i32_0 = arith.constant 0 : i32
    return %arg0, %c0_i32 : i32, i32
  }
}

</mosaic_0001>

<llo_original>
// kernel: tpu_custom_call.1
$region0: #{tpu_custom_call.1}
  #allocation0 [shape = 'u32[]', space=smem, size = 0x4, offset = 0x4, fixed_abs, tag = 'smem constant byte address 0x4 - core index']
  #allocation1 [shape = 'u32[144,128]{1,0:T(1,128)}', space=vmem, size = 0x12000, scoped, tag = 'internal scratch']
  %s0 = inlined_call_operand.hbm [shape: s32[8,8], index: 0, kind: input, shape index: {}]
  %s1 = inlined_call_operand.hbm [shape: f32[32,32], index: 1, kind: input, shape index: {}]
  %s2 = inlined_call_operand.vmem [shape: f32[1,32], index: 2, kind: input, shape index: {}]
  %s3 = inlined_call_operand.hbm [shape: f32[8,32], index: 3, kind: output, shape index: {}]
  %s4 = sld [smem:[#allocation0]]
  $region30: #{tpu_custom_call.1} parent=0
    _
  %s6 = ssub.s32 1, %s4
  %s7 = scalar_select 0, %s6, %s4
  $region1: #{tpu_custom_call.1} parent=0
    #allocation2 [shape = 'u8[4096]{0}', space=vmem, size = 0x1000, scoped, tag = 'input window, operand 0, single buffered']
    #allocation3 [shape = 's32[1]{0}', space=sflag, size = 0x4, scoped, tag = 'scoped memory for tpu_custom_call.1']
    #allocation4 [shape = 's32[1]{0}', space=sflag, size = 0x4, scoped, tag = 'scoped memory for tpu_custom_call.1']
    #allocation5 [shape = 'u8[16384]{0}', space=vmem, size = 0x4000, scoped, tag = 'input window, operand 1, single buffered']
    #allocation6 [shape = 's32[1]{0}', space=sflag, size = 0x4, scoped, tag = 'scoped memory for tpu_custom_call.1']
    #allocation7 [shape = 'u8[4096]{0}', space=vmem, size = 0x1000, scoped, tag = 'output window, operand 0, single buffered']
    %8 = vsyncpa [#allocation3], 0
    %9 = vsyncpa [#allocation6], 0
    %10 = vsyncpa [#allocation4], 0
    // Predicated region
    $region2: #{tpu_custom_call.1} parent=1 // pred_check
      _
    $region3: #{tpu_custom_call.1} parent=1 // pred_check_branch
      %12 = sbr.rel (0) target = $region5
    $region4: #{tpu_custom_call.1} parent=1 // pred_region
      %s14 = ssub.s32 128, 128
      %15 = vsyncadd [#allocation3], %s14
      %s17 = sshll.u32 [#allocation2], 4
      %s18 = int_to_ptr.vmem [resolvable:$true] %s17
      %20 = dma.hbm_to_vmem [thread:$0]  %s0, 128, %s18, [#allocation3]
    $region5: #{tpu_custom_call.1} parent=1 // pred_fallthru
      _
    // Predicated region
    $region6: #{tpu_custom_call.1} parent=1 // pred_check
      _
    $region7: #{tpu_custom_call.1} parent=1 // pred_check_branch
      %22 = sbr.rel (0) target = $region9
    $region8: #{tpu_custom_call.1} parent=1 // pred_region
      %s24 = ssub.s32 512, 512
      %25 = vsyncadd [#allocation6], %s24
      %s26 = sshll.u32 [#allocation5], 4
      %s27 = int_to_ptr.vmem [resolvable:$true] %s26
      %32 = dma.hbm_to_vmem [thread:$0]  %s1, 512, %s27, [#allocation6], 128, 128, 8
    $region9: #{tpu_custom_call.1} parent=1 // pred_fallthru
      _
    // Predicated region
    $region10: #{tpu_custom_call.1} parent=1 // pred_check
      _
    $region11: #{tpu_custom_call.1} parent=1 // pred_check_branch
      %34 = sbr.rel (0) target = $region13
    $region12: #{tpu_custom_call.1} parent=1 // pred_region
      _
    $region13: #{tpu_custom_call.1} parent=1 // pred_fallthru
      _
    // Predicated region
    $region14: #{tpu_custom_call.1} parent=1 // pred_check
      _
    $region15: #{tpu_custom_call.1} parent=1 // pred_check_branch
      %36 = sbr.rel (0) target = $region17
    $region16: #{tpu_custom_call.1} parent=1 // pred_region
      %37 = dma.done [#allocation3], 128
    $region17: #{tpu_custom_call.1} parent=1 // pred_fallthru
      _
    // Predicated region
    $region18: #{tpu_custom_call.1} parent=1 // pred_check
      _
    $region19: #{tpu_custom_call.1} parent=1 // pred_check_branch
      %39 = sbr.rel (0) target = $region21
    $region20: #{tpu_custom_call.1} parent=1 // pred_region
      %40 = dma.done [#allocation6], 512
    $region21: #{tpu_custom_call.1} parent=1 // pred_fallthru
      _
    %v41 = vld [vmem:[#allocation2] sm:$0xff]
    %v42 = vlaneseq
    %v43 = vshrl.u32 %v42, 7
    %v44 = vsub.s32 0, %v43
    %v45 = vrot.slane %v41, %v44
    %47 = vbcast.lane.b32.xlu0 %v45, 256
    %v48 = vpop.permute.xlu0 %47
    %v49 = vlaneseq
    %v50 = vshrl.u32 %v49, 7
    %v51 = vsub.s32 1, %v50
    %v52 = vrot.slane %v41, %v51
    %54 = vbcast.lane.b32.xlu0 %v52, 256
    %v55 = vpop.permute.xlu0 %54
    %v56 = vlaneseq
    %v57 = vshrl.u32 %v56, 7
    %v58 = vsub.s32 2, %v57
    %v59 = vrot.slane %v41, %v58
    %61 = vbcast.lane.b32.xlu0 %v59, 256
    %v62 = vpop.permute.xlu0 %61
    %v63 = vlaneseq
    %v64 = vshrl.u32 %v63, 7
    %v65 = vsub.s32 3, %v64
    %v66 = vrot.slane %v41, %v65
    %68 = vbcast.lane.b32.xlu0 %v66, 256
    %v69 = vpop.permute.xlu0 %68
    %v70 = vlaneseq
    %v71 = vshrl.u32 %v70, 7
    %v72 = vsub.s32 4, %v71
    %v73 = vrot.slane %v41, %v72
    %75 = vbcast.lane.b32.xlu0 %v73, 256
    %v76 = vpop.permute.xlu0 %75
    %v77 = vlaneseq
    %v78 = vshrl.u32 %v77, 7
    %v79 = vsub.s32 5, %v78
    %v80 = vrot.slane %v41, %v79
    %82 = vbcast.lane.b32.xlu0 %v80, 256
    %v83 = vpop.permute.xlu0 %82
    %v84 = vlaneseq
    %v85 = vshrl.u32 %v84, 7
    %v86 = vsub.s32 6, %v85
    %v87 = vrot.slane %v41, %v86
    %89 = vbcast.lane.b32.xlu0 %v87, 256
    %v90 = vpop.permute.xlu0 %89
    %v91 = vlaneseq
    %v92 = vshrl.u32 %v91, 7
    %v93 = vsub.s32 7, %v92
    %v94 = vrot.slane %v41, %v93
    %96 = vbcast.lane.b32.xlu0 %v94, 256
    %v97 = vpop.permute.xlu0 %96
    %v98 = vlaneseq
    %v99 = vand.u32 %v98, 127
    %vm100 = vcmp.eq.s32.totalorder %v48, %v99
    %vm101 = vcmp.eq.s32.totalorder %v55, %v99
    %vm102 = vcmp.eq.s32.totalorder %v62, %v99
    %vm103 = vcmp.eq.s32.totalorder %v69, %v99
    %vm104 = vcmp.eq.s32.totalorder %v76, %v99
    %vm105 = vcmp.eq.s32.totalorder %v83, %v99
    %vm106 = vcmp.eq.s32.totalorder %v90, %v99
    %vm107 = vcmp.eq.s32.totalorder %v97, %v99
    %v108 = vsel %vm100, 1, 0
    %v109 = vsel %vm101, 1, 0
    %v110 = vsel %vm102, 1, 0
    %v111 = vsel %vm103, 1, 0
    %v112 = vsel %vm104, 1, 0
    %v113 = vsel %vm105, 1, 0
    %v114 = vsel %vm106, 1, 0
    %v115 = vsel %vm107, 1, 0
    %v116 = vcvt.s32.f32 %v108
    %v117 = vcvt.s32.f32 %v109
    %v118 = vcvt.s32.f32 %v110
    %v119 = vcvt.s32.f32 %v111
    %v120 = vcvt.s32.f32 %v112
    %v121 = vcvt.s32.f32 %v113
    %v122 = vcvt.s32.f32 %v114
    %v123 = vcvt.s32.f32 %v115
    %vm124 = vcmask 261120
    %v125 = vsel %vm124, %v116, 0.0
    %v126 = vrot.slane %v125, 4
    %v127 = vadd.f32 %v125, %v126
    %v128 = vrot.slane %v127, 2
    %v129 = vadd.f32 %v127, %v128
    %v130 = vrot.slane %v129, 1
    %v131 = vadd.f32 %v129, %v130
    %v132 = vsel %vm124, %v117, 0.0
    %v133 = vrot.slane %v132, 4
    %v134 = vadd.f32 %v132, %v133
    %v135 = vrot.slane %v134, 2
    %v136 = vadd.f32 %v134, %v135
    %v137 = vrot.slane %v136, 1
    %v138 = vadd.f32 %v136, %v137
    %v139 = vsel %vm124, %v118, 0.0
    %v140 = vrot.slane %v139, 4
    %v141 = vadd.f32 %v139, %v140
    %v142 = vrot.slane %v141, 2
    %v143 = vadd.f32 %v141, %v142
    %v144 = vrot.slane %v143, 1
    %v145 = vadd.f32 %v143, %v144
    %v146 = vsel %vm124, %v119, 0.0
    %v147 = vrot.slane %v146, 4
    %v148 = vadd.f32 %v146, %v147
    %v149 = vrot.slane %v148, 2
    %v150 = vadd.f32 %v148, %v149
    %v151 = vrot.slane %v150, 1
    %v152 = vadd.f32 %v150, %v151
    %v153 = vsel %vm124, %v120, 0.0
    %v154 = vrot.slane %v153, 4
    %v155 = vadd.f32 %v153, %v154
    %v156 = vrot.slane %v155, 2
    %v157 = vadd.f32 %v155, %v156
    %v158 = vrot.slane %v157, 1
    %v159 = vadd.f32 %v157, %v158
    %v160 = vsel %vm124, %v121, 0.0
    %v161 = vrot.slane %v160, 4
    %v162 = vadd.f32 %v160, %v161
    %v163 = vrot.slane %v162, 2
    %v164 = vadd.f32 %v162, %v163
    %v165 = vrot.slane %v164, 1
    %v166 = vadd.f32 %v164, %v165
    %v167 = vsel %vm124, %v122, 0.0
    %v168 = vrot.slane %v167, 4
    %v169 = vadd.f32 %v167, %v168
    %v170 = vrot.slane %v169, 2
    %v171 = vadd.f32 %v169, %v170
    %v172 = vrot.slane %v171, 1
    %v173 = vadd.f32 %v171, %v172
    %v174 = vsel %vm124, %v123, 0.0
    %v175 = vrot.slane %v174, 4
    %v176 = vadd.f32 %v174, %v175
    %v177 = vrot.slane %v176, 2
    %v178 = vadd.f32 %v176, %v177
    %v179 = vrot.slane %v178, 1
    %v180 = vadd.f32 %v178, %v179
    %v181 = vld [vmem:[#allocation5] sm:$0xff]
    %v182 = vld [vmem:[#allocation5 + $0x8] sm:$0xff]
    %v183 = vld [vmem:[#allocation5 + $0x10] sm:$0xff]
    %v184 = vld [vmem:[#allocation5 + $0x18] sm:$0xff]
    %v185 = vld [vmem:[%s2] sm:$0x1]
    %v187 = vlaneseq
    %v188 = vshrl.u32 %v187, 7
    %v189 = vsub.s32 0, %v188
    %v190 = vrot.slane %v185, %v189
    %vm200 = vcmask 1041409
    %v201 = vsel %vm200, %v138, %v131
    %vm202 = vcmask 1042434
    %v203 = vsel %vm202, %v145, %v201
    %vm204 = vcmask 1043459
    %v205 = vsel %vm204, %v152, %v203
    %vm206 = vcmask 1044484
    %v207 = vsel %vm206, %v159, %v205
    %vm208 = vcmask 1045509
    %v209 = vsel %vm208, %v166, %v207
    %vm210 = vcmask 1046534
    %v211 = vsel %vm210, %v173, %v209
    %vm212 = vcmask 1047559
    %v213 = vsel %vm212, %v180, %v211
    %v214 = vsel %vm124, %v213, 0
    %216 = vmatprep.subr.mxu0 0.0
    %217 = vmatpush1.msra.mxu0 0.0
    %218 = vmatprep.subr.mxu0 0.0
    %219 = vmatpush1.msra.mxu0 0.0
    %220 = vmatprep.subr.mxu0 0.0
    %221 = vmatpush1.msra.mxu0 0.0
    %222 = vmatprep.subr.mxu0 0.0
    %223 = vmatpush1.msra.mxu0 0.0
    %224 = vmatprep.subr.mxu0 0.0
    %225 = vmatpush1.msra.mxu0 0.0
    %226 = vmatprep.subr.mxu0 0.0
    %227 = vmatpush1.msra.mxu0 0.0
    %228 = vmatprep.subr.mxu0 0.0
    %229 = vmatpush1.msra.mxu0 0.0
    %230 = vmatprep.subr.mxu0 0.0
    %231 = vmatpush1.msra.mxu0 0.0
    %232 = vmatprep.subr.mxu0 0.0
    %233 = vmatpush1.msra.mxu0 0.0
    %234 = vmatprep.subr.mxu0 0.0
    %235 = vmatpush1.msra.mxu0 0.0
    %236 = vmatprep.subr.mxu0 0.0
    %237 = vmatpush1.msra.mxu0 0.0
    %238 = vmatprep.subr.mxu0 0.0
    %239 = vmatpush1.msra.mxu0 0.0
    %240 = vmatprep.subr.mxu0 0.0
    %241 = vmatpush1.msra.mxu0 %v184
    %242 = vmatprep.subr.mxu0 0.0
    %243 = vmatpush1.msra.mxu0 %v183
    %244 = vmatprep.subr.mxu0 0.0
    %245 = vmatpush1.msra.mxu0 %v182
    %246 = vmatprep.subr.mxu0 0.0
    %247 = vmatpush1.msra.mxu0 %v181
    %248 = vmatprep.subr.mxu0 0.0
    %249 = vmatpush2.msra.mxu0 0.0
    %250 = vmatprep.subr.mxu0 0.0
    %251 = vmatpush2.msra.mxu0 0.0
    %252 = vmatprep.subr.mxu0 0.0
    %253 = vmatpush2.msra.mxu0 0.0
    %254 = vmatprep.subr.mxu0 0.0
    %255 = vmatpush2.msra.mxu0 0.0
    %256 = vmatprep.subr.mxu0 0.0
    %257 = vmatpush2.msra.mxu0 0.0
    %258 = vmatprep.subr.mxu0 0.0
    %259 = vmatpush2.msra.mxu0 0.0
    %260 = vmatprep.subr.mxu0 0.0
    %261 = vmatpush2.msra.mxu0 0.0
    %262 = vmatprep.subr.mxu0 0.0
    %263 = vmatpush2.msra.mxu0 0.0
    %264 = vmatprep.subr.mxu0 0.0
    %265 = vmatpush2.msra.mxu0 0.0
    %266 = vmatprep.subr.mxu0 0.0
    %267 = vmatpush2.msra.mxu0 0.0
    %268 = vmatprep.subr.mxu0 0.0
    %269 = vmatpush2.msra.mxu0 0.0
    %270 = vmatprep.subr.mxu0 0.0
    %271 = vmatpush2.msra.mxu0 0.0
    %272 = vmatprep.subr.mxu0 0.0
    %273 = vmatpush2.msra.mxu0 0.0
    %274 = vmatprep.subr.mxu0 0.0
    %275 = vmatpush2.msra.mxu0 0.0
    %276 = vmatprep.subr.mxu0 0.0
    %277 = vmatpush2.msra.mxu0 0.0
    %278 = vmatprep.subr.mxu0 0.0
    %279 = vmatpush2.msra.mxu0 0.0
    %280 = vmatprep.mubr.f32.mxu0 0.0
    %281 = vmatmul.mubr.f32.gmra.mxu0 %v214
    %v282 = vpop.f32.mrf.mxu0
    %v283 = vadd.f32 %v190, %v282
    %v284 = vpop.f32.mrf.mxu0
    %285 = vdwg.mxu0
    %286 = vst.msk [vmem:[#allocation7] sm:$0xff] %vm124, %v283
    // Predicated region
    $region22: #{tpu_custom_call.1} parent=1 // pred_check
      _
    $region23: #{tpu_custom_call.1} parent=1 // pred_check_branch
      %288 = sbr.rel (0) target = $region25
    $region24: #{tpu_custom_call.1} parent=1 // pred_region
      %s290 = ssub.s32 128, 128
      %291 = vsyncadd [#allocation4], %s290
      %s293 = sshll.u32 [#allocation7], 4
      %s294 = int_to_ptr.vmem [resolvable:$true] %s293
      %296 = dma.vmem_to_hbm [thread:$0]  %s294, 128, %s3, [#allocation4]
    $region25: #{tpu_custom_call.1} parent=1 // pred_fallthru
      _
    // Predicated region
    $region26: #{tpu_custom_call.1} parent=1 // pred_check
      _
    $region27: #{tpu_custom_call.1} parent=1 // pred_check_branch
      %298 = sbr.rel (0) target = $region29
    $region28: #{tpu_custom_call.1} parent=1 // pred_region
      %299 = dma.done [#allocation4], 128
    $region29: #{tpu_custom_call.1} parent=1 // pred_fallthru
      _
    %300 = vsyncpa [#allocation3], 1
    %301 = vsyncpa [#allocation6], 1
    %302 = vsyncpa [#allocation4], 1

</llo_original>
